<compile_context>
chip_gen: v5e
topology: v5e:2x2
jax: 0.10.0
libtpu: 0.0.40
codegen_flags: <defaults>
</compile_context>

<pallas_src>
import jax
import jax.numpy as jnp
from jax.experimental import pallas as pl
from jax.experimental.pallas import tpu as pltpu


def fcnn_masternode_kernel(scalars_ref,                 # SMEM (2,) f32: [w0, b3]
                           t_ref,                       # (1, TB)  f32 input tile
                           w1_ref, b1_ref,              # (H, 1), (H, 1)  compute dtype
                           w2_ref, b2_ref,              # (H, H), (H, 1)  compute dtype
                           w3_ref,                      # (1, H)          compute dtype
                           o_ref):                      # (1, TB)  f32 output tile
    cd = w2_ref.dtype                                   # compute dtype (f32 or bf16)

    w0 = scalars_ref[0]                                 # scalar, f32
    b3 = scalars_ref[1]                                 # scalar, f32

    # Layer 0 (Linear 1->1, no bias) folded into the sin argument; sin in f32.
    s = jnp.sin(t_ref[...] * w0).astype(cd)             # (1, TB)

    # Layer 1: Linear(1->H) on the MXU (M=H, K=1, N=TB), f32 accumulation.
    pre1 = jnp.dot(w1_ref[...], s, preferred_element_type=jnp.float32)
    h1 = jnp.tanh(pre1.astype(cd) + b1_ref[...])        # (H, TB), compute dtype

    # Hidden layer: Linear(H->H) on the MXU, f32 accumulation, tanh in cd.
    acc = jnp.dot(w2_ref[...], h1, preferred_element_type=jnp.float32)
    h2 = jnp.tanh(acc.astype(cd) + b2_ref[...])         # (H, TB), compute dtype

    # Output layer: Linear(H->1) on the MXU (M=1, K=H, N=TB), f32 accumulation.
    out = jnp.dot(w3_ref[...], h2, preferred_element_type=jnp.float32) + b3
    o_ref[...] = out.astype(o_ref.dtype)                # (1, TB) lane-dense store


def _choose_batch_tile(B, max_tile=1024):
    """Pick a lane-dense tile (multiple of 128) giving >=2 grid tiles when
    possible, so dimension_semantics=('parallel',) uses both v7x TensorCores."""
    half_lanes = (pl.cdiv(B, 2) + 127) // 128
    return int(min(max_tile, max(1, half_lanes) * 128))


def fcnn_masternode_pallas(t, params, *, batch_tile=None,
                           compute_dtype=jnp.float32):
    """t: (B, 1) float32. Returns (B, 1) float32.

    compute_dtype: jnp.float32 (default; required on v5e) or jnp.bfloat16
    (recommended on v6e/v7x: tanh on the EUP and the elementwise work run at
    2x throughput; matmuls still accumulate in f32, output is f32).
    """
    B = t.shape[0]
    H = params["w2"].shape[0]

    tb = _choose_batch_tile(B) if batch_tile is None else int(batch_tile)
    assert tb % 128 == 0, "batch_tile must be a multiple of 128 (lane width)"

    num_tiles = pl.cdiv(B, tb)
    Bp = num_tiles * tb

    # Transpose to lane-dense (1, B) and pad batch up to a tile multiple.
    # Padded tail runs through sin/tanh (bounded, no NaN risk) and is sliced off.
    t_lane = jnp.pad(t.astype(jnp.float32).reshape(1, B), ((0, 0), (0, Bp - B)))

    cd = compute_dtype
    w1 = params["w1"].astype(cd)                         # (H, 1)
    b1 = params["b1"].astype(cd)                         # (H, 1)
    w2 = params["w2"].astype(cd)                         # (H, H)
    b2 = params["b2"].astype(cd)                         # (H, 1)
    w3 = params["w3"].reshape(1, H).astype(cd)           # (1, H) row for the MXU
    scalars = jnp.stack([params["w0"].reshape(()),       # SMEM scalars: w0, b3
                         params["b3"].reshape(())]).astype(jnp.float32)

    const = lambda i, s: (0, 0)                          # weights stay resident
    grid_spec = pltpu.PrefetchScalarGridSpec(
        num_scalar_prefetch=1,                           # scalars -> SMEM
        grid=(num_tiles,),
        in_specs=[
            pl.BlockSpec((1, tb), lambda i, s: (0, i)),  # t tile (pipelined)
            pl.BlockSpec((H, 1), const),                 # w1
            pl.BlockSpec((H, 1), const),                 # b1
            pl.BlockSpec((H, H), const),                 # w2
            pl.BlockSpec((H, 1), const),                 # b2
            pl.BlockSpec((1, H), const),                 # w3 (row)
        ],
        out_specs=pl.BlockSpec((1, tb), lambda i, s: (0, i)),
    )

    out_lane = pl.pallas_call(
        fcnn_masternode_kernel,
        out_shape=jax.ShapeDtypeStruct((1, Bp), jnp.float32),
        grid_spec=grid_spec,
        compiler_params=pltpu.CompilerParams(
            dimension_semantics=("parallel",),           # megacore split on v7x
            vmem_limit_bytes=32 * 1024 * 1024,           # safe on v5e/v6e/v7x
        ),
    )(scalars, t_lane, w1, b1, w2, b2, w3)

    return out_lane[0, :B].reshape(B, 1)


def fcnn_masternode_ref(t, params):
    """Pure-JAX reference mirroring the PyTorch Sequential (all f32)."""
    h = t * params["w0"][0, 0]                               # Linear(1,1,bias=False)
    h = jnp.sin(h)                                           # SineFunction
    h = jnp.tanh(h @ params["w1"].T + params["b1"].T)        # Linear(1,H) + tanh
    h = jnp.tanh(h @ params["w2"].T + params["b2"].T)        # Linear(H,H) + tanh
    h = h @ params["w3"] + params["b3"].T                    # Linear(H,1)
    return h


def init_params(key, n_input=1, n_output=1, n_hidden=32):
    """Weights in PyTorch (out, in) form; biases as (out, 1) columns."""
    ks = jax.random.split(key, 7)

    def u(k, shape, fan_in):
        bound = 1.0 / jnp.sqrt(jnp.float32(fan_in))
        return jax.random.uniform(k, shape, jnp.float32, -bound, bound)

    H = n_hidden
    return {
        "w0": u(ks[0], (n_input, n_input), n_input),   # (1, 1)
        "w1": u(ks[1], (H, n_input), n_input),         # (H, 1)
        "b1": u(ks[2], (H, 1), n_input),               # (H, 1)
        "w2": u(ks[3], (H, H), H),                     # (H, H)
        "b2": u(ks[4], (H, 1), H),                     # (H, 1)
        "w3": u(ks[5], (H, n_output), H),              # (H, 1)  (= PyTorch (1,H).T)
        "b3": u(ks[6], (n_output, 1), H),              # (1, 1)
    }


if __name__ == "__main__":
    key = jax.random.PRNGKey(0)
    k_param, _ = jax.random.split(key)

    params = init_params(k_param, n_input=1, n_output=1, n_hidden=32)

    # t = linspace(a, b, 500) like the original script; shape (B, 1).
    B = 500
    t = jnp.linspace(0.0, 3.0, B, dtype=jnp.float32).reshape(B, 1)

    ref = fcnn_masternode_ref(t, params)

    # f32 path, auto tile (=> 2 tiles of 256: both TensorCores busy on v7x).
    out_f32 = jax.block_until_ready(
        fcnn_masternode_pallas(t, params, compute_dtype=jnp.float32))
    assert out_f32.shape == (B, 1)
    assert jnp.allclose(out_f32, ref, atol=1e-5, rtol=1e-5)

    # f32 path, explicit small tile: exercises a 4-step grid with a padded tail.
    out_f32_small = jax.block_until_ready(
        fcnn_masternode_pallas(t, params, batch_tile=128,
                               compute_dtype=jnp.float32))
    assert jnp.allclose(out_f32_small, ref, atol=1e-5, rtol=1e-5)

    # bf16 compute path (recommended on v6e/v7x); f32 accumulation, loose tol.
    out_bf16 = jax.block_until_ready(
        fcnn_masternode_pallas(t, params, compute_dtype=jnp.bfloat16))
    assert out_bf16.shape == (B, 1)
    assert jnp.allclose(out_bf16, ref, atol=3e-2, rtol=3e-2)

    print("KERNEL_OK")
</pallas_src>

<mosaic_0001>
module attributes {stable_mosaic.version = 11 : i64} {
  func.func @fcnn_masternode_kernel(%arg0: i32, %arg1: memref<2xf32, #tpu.memory_space<smem>>, %arg2: memref<1x256xf32, #tpu.memory_space<vmem>>, %arg3: memref<32x1xf32, #tpu.memory_space<vmem>>, %arg4: memref<32x1xf32, #tpu.memory_space<vmem>>, %arg5: memref<32x32xf32, #tpu.memory_space<vmem>>, %arg6: memref<32x1xf32, #tpu.memory_space<vmem>>, %arg7: memref<1x32xf32, #tpu.memory_space<vmem>>, %arg8: memref<1x256xf32, #tpu.memory_space<vmem>>) attributes {dimension_semantics = [#tpu.dimension_semantics<parallel>], iteration_bounds = array<i64: 2>, scalar_prefetch = 1 : i64, scratch_operands = 0 : i64, tpu.core_type = #tpu.core_type<tc>, window_params = [{transform_indices = @transform_0, window_bounds = array<i64: 1, 256>}, {pipeline_mode = #tpu.pipeline_mode<synchronous>, transform_indices = @transform_1, window_bounds = array<i64: 32, 1>}, {pipeline_mode = #tpu.pipeline_mode<synchronous>, transform_indices = @transform_2, window_bounds = array<i64: 32, 1>}, {pipeline_mode = #tpu.pipeline_mode<synchronous>, transform_indices = @transform_3, window_bounds = array<i64: 32, 32>}, {pipeline_mode = #tpu.pipeline_mode<synchronous>, transform_indices = @transform_4, window_bounds = array<i64: 32, 1>}, {pipeline_mode = #tpu.pipeline_mode<synchronous>, transform_indices = @transform_5, window_bounds = array<i64: 1, 32>}, {transform_indices = @transform_6, window_bounds = array<i64: 1, 256>}]} {
    %c0 = arith.constant 0 : index
    %0 = memref.load %arg1[%c0] : memref<2xf32, #tpu.memory_space<smem>>
    %c1 = arith.constant 1 : index
    %1 = memref.load %arg1[%c1] : memref<2xf32, #tpu.memory_space<smem>>
    %c0_0 = arith.constant 0 : index
    %c0_1 = arith.constant 0 : index
    %2 = vector.load %arg2[%c0_0, %c0_1] : memref<1x256xf32, #tpu.memory_space<vmem>>, vector<1x256xf32>
    %3 = vector.broadcast %0 : f32 to vector<1x256xf32>
    %4 = arith.mulf %2, %3 : vector<1x256xf32>
    %5 = math.sin %4 : vector<1x256xf32>
    %c0_2 = arith.constant 0 : index
    %c0_3 = arith.constant 0 : index
    %6 = vector.load %arg3[%c0_2, %c0_3] : memref<32x1xf32, #tpu.memory_space<vmem>>, vector<32x1xf32>
    %cst = arith.constant dense<0.000000e+00> : vector<32x256xf32>
    %7 = tpu.matmul %6, %5, %cst {dimension_numbers = #tpu.dot_dimension_numbers<[1], [0], [0], [1], [0, 0, 1, 1], [], []>} : vector<32x1xf32>, vector<1x256xf32>, vector<32x256xf32> -> vector<32x256xf32>
    %c0_4 = arith.constant 0 : index
    %c0_5 = arith.constant 0 : index
    %8 = vector.load %arg4[%c0_4, %c0_5] : memref<32x1xf32, #tpu.memory_space<vmem>>, vector<32x1xf32>
    %9 = vector.broadcast %8 : vector<32x1xf32> to vector<32x256xf32>
    %10 = arith.addf %7, %9 : vector<32x256xf32>
    %11 = math.tanh %10 : vector<32x256xf32>
    %c0_6 = arith.constant 0 : index
    %c0_7 = arith.constant 0 : index
    %12 = vector.load %arg5[%c0_6, %c0_7] : memref<32x32xf32, #tpu.memory_space<vmem>>, vector<32x32xf32>
    %cst_8 = arith.constant dense<0.000000e+00> : vector<32x256xf32>
    %13 = tpu.matmul %12, %11, %cst_8 {dimension_numbers = #tpu.dot_dimension_numbers<[1], [0], [0], [1], [0, 0, 1, 1], [], []>} : vector<32x32xf32>, vector<32x256xf32>, vector<32x256xf32> -> vector<32x256xf32>
    %c0_9 = arith.constant 0 : index
    %c0_10 = arith.constant 0 : index
    %14 = vector.load %arg6[%c0_9, %c0_10] : memref<32x1xf32, #tpu.memory_space<vmem>>, vector<32x1xf32>
    %15 = vector.broadcast %14 : vector<32x1xf32> to vector<32x256xf32>
    %16 = arith.addf %13, %15 : vector<32x256xf32>
    %17 = math.tanh %16 : vector<32x256xf32>
    %c0_11 = arith.constant 0 : index
    %c0_12 = arith.constant 0 : index
    %18 = vector.load %arg7[%c0_11, %c0_12] : memref<1x32xf32, #tpu.memory_space<vmem>>, vector<1x32xf32>
    %cst_13 = arith.constant dense<0.000000e+00> : vector<1x256xf32>
    %19 = tpu.matmul %18, %17, %cst_13 {dimension_numbers = #tpu.dot_dimension_numbers<[1], [0], [0], [1], [0, 0, 1, 1], [], []>} : vector<1x32xf32>, vector<32x256xf32>, vector<1x256xf32> -> vector<1x256xf32>
    %20 = vector.broadcast %1 : f32 to vector<1x256xf32>
    %21 = arith.addf %19, %20 : vector<1x256xf32>
    %c0_14 = arith.constant 0 : index
    %c0_15 = arith.constant 0 : index
    %22 = vector.load %arg8[%c0_14, %c0_15] : memref<1x256xf32, #tpu.memory_space<vmem>>, vector<1x256xf32>
    tpu.vector_store %arg8[%c0_14, %c0_15], %21 {strides = array<i32>} : memref<1x256xf32, #tpu.memory_space<vmem>>, vector<1x256xf32>,
    return
  }
  func.func @transform_0(%arg0: i32, %arg1: memref<2xf32, #tpu.memory_space<smem>>) -> (i32, i32) {
    %c0_i32 = arith.constant 0 : i32
    %c0_i32_0 = arith.constant 0 : i32
    return %c0_i32, %arg0 : i32, i32
  }
  func.func @transform_1(%arg0: i32, %arg1: memref<2xf32, #tpu.memory_space<smem>>) -> (i32, i32) {
    %c0_i32 = arith.constant 0 : i32
    %c0_i32_0 = arith.constant 0 : i32
    %c0_i32_1 = arith.constant 0 : i32
    return %c0_i32, %c0_i32_0 : i32, i32
  }
  func.func @transform_2(%arg0: i32, %arg1: memref<2xf32, #tpu.memory_space<smem>>) -> (i32, i32) {
    %c0_i32 = arith.constant 0 : i32
    %c0_i32_0 = arith.constant 0 : i32
    %c0_i32_1 = arith.constant 0 : i32
    return %c0_i32, %c0_i32_0 : i32, i32
  }
  func.func @transform_3(%arg0: i32, %arg1: memref<2xf32, #tpu.memory_space<smem>>) -> (i32, i32) {
    %c0_i32 = arith.constant 0 : i32
    %c0_i32_0 = arith.constant 0 : i32
    %c0_i32_1 = arith.constant 0 : i32
    return %c0_i32, %c0_i32_0 : i32, i32
  }
  func.func @transform_4(%arg0: i32, %arg1: memref<2xf32, #tpu.memory_space<smem>>) -> (i32, i32) {
    %c0_i32 = arith.constant 0 : i32
    %c0_i32_0 = arith.constant 0 : i32
    %c0_i32_1 = arith.constant 0 : i32
    return %c0_i32, %c0_i32_0 : i32, i32
  }
  func.func @transform_5(%arg0: i32, %arg1: memref<2xf32, #tpu.memory_space<smem>>) -> (i32, i32) {
    %c0_i32 = arith.constant 0 : i32
    %c0_i32_0 = arith.constant 0 : i32
    %c0_i32_1 = arith.constant 0 : i32
    return %c0_i32, %c0_i32_0 : i32, i32
  }
  func.func @transform_6(%arg0: i32, %arg1: memref<2xf32, #tpu.memory_space<smem>>) -> (i32, i32) {
    %c0_i32 = arith.constant 0 : i32
    %c0_i32_0 = arith.constant 0 : i32
    return %c0_i32, %arg0 : i32, i32
  }
}

</mosaic_0001>

<llo_original>
// kernel: tpu_custom_call.1
$region0: #{tpu_custom_call.1}
  #allocation0 [shape = 'u32[]', space=smem, size = 0x4, offset = 0x4, fixed_abs, tag = 'smem constant byte address 0x4 - core index']
  #allocation1 [shape = 'u32[72,128]{1,0:T(1,128)}', space=vmem, size = 0x9000, scoped, tag = 'internal scratch']
  #allocation2 [shape = 's32[1]{0}', space=sflag, size = 0x4, scoped, tag = 'scoped memory for tpu_custom_call.1']
  #allocation3 [shape = 'u8[512]{0}', space=smem, size = 0x200, scoped, tag = 'prefetched SMEM operand 0']
  %s0 = inlined_call_operand.vmem [shape: f32[2], index: 0, kind: input, shape index: {}]
  %s1 = inlined_call_operand.vmem [shape: f32[1,512], index: 1, kind: input, shape index: {}]
  %s2 = inlined_call_operand.vmem [shape: f32[32,1], index: 2, kind: input, shape index: {}]
  %s3 = inlined_call_operand.vmem [shape: f32[32,1], index: 3, kind: input, shape index: {}]
  %s4 = inlined_call_operand.vmem [shape: f32[32,32], index: 4, kind: input, shape index: {}]
  %s5 = inlined_call_operand.vmem [shape: f32[32,1], index: 5, kind: input, shape index: {}]
  %s6 = inlined_call_operand.vmem [shape: f32[1,32], index: 6, kind: input, shape index: {}]
  %s7 = inlined_call_operand.hbm [shape: f32[1,512], index: 7, kind: output, shape index: {}]
  %s8 = sld [smem:[#allocation0]]
  $region57: #{tpu_custom_call.1} parent=0
    _
  %s10 = ssub.s32 1, %s8
  %s11 = scalar_select 0, %s10, %s8
  %s13 = sshll.u32 %s0, 4
  %s14 = int_to_ptr.vmem [resolvable:$true] %s13
  %16 = dma.vmem_to_smem %s14, 16, [#allocation3], [#allocation2]
  %18 = dma.done [#allocation2], 16
  %19 = sfence
  $region1: #{tpu_custom_call.1} parent=0
    #allocation4 [shape = 'u8[2048]{0}', space=vmem, size = 0x800, scoped, tag = 'output window, operand 0']
    #allocation5 [shape = 's32[2]{0}', space=sflag, size = 0x8, scoped, tag = 'scoped memory for tpu_custom_call.1']
    %20 = vsyncpa [#allocation5], 0
    %s21 = scalar_lea.sflag [#allocation5], 1
    %22 = vsyncpa %s21, 0
    loop: start=0, step=1, limit=4
    $region2: #{tpu_custom_call.1} parent=1 // loop_pre_header
      _
    $region3: #{tpu_custom_call.1} parent=1 // loop_header
      %s24 = sphi 0, %s28
      %p25 = scmp.ge.s32.totalorder %s24, 4
      %s34 = sphi 0, %s36
      %s37 = sphi 0, %s34
      %s38 = sphi 0, %s37
      %s54 = sphi 0, %s38
      %s58 = sphi 0, %s58
      %s60 = sphi 0, %s58
      %s61 = sphi 0, %s60
      %s75 = sphi 0, %s61
      %s79 = sphi 0, %s79
      %s81 = sphi 0, %s79
      %s82 = sphi 0, %s81
      %s96 = sphi 0, %s82
      %s100 = sphi 0, %s100
      %s102 = sphi 0, %s100
      %s103 = sphi 0, %s102
      %s117 = sphi 0, %s103
      %s121 = sphi 0, %s121
      %s123 = sphi 0, %s121
      %s124 = sphi 0, %s123
      %s138 = sphi 0, %s124
      %s142 = sphi 0, %s142
      %s144 = sphi 0, %s142
      %s145 = sphi 0, %s144
      %s159 = sphi 0, %s145
      %s165 = sphi 0, %s167
      %s168 = sphi 0, %s165
      %s169 = sphi 0, %s168
      %s185 = sphi 0, %s169
    $region4: #{tpu_custom_call.1} parent=1 // loop_header_branch
      %27 = sbr.rel (%p25) target = $region8
    $region5: #{tpu_custom_call.1} parent=1 // loop_body
      %s29 = ssub.s32 %s24, 1
      %s30 = ssub.s32 %s24, 2
      %s31 = sadd.s32 %s24, 1
      %s32 = ssub.s32 %s24, %s31
      %p33 = scmp.eq.s32.totalorder %s32, 0
      %s35 = sadd.s32 %s34, 1
      %s36 = scalar_select %p33, %s34, %s35
      %p39 = pneg %p33
      %p40 = scmp.eq.s32.totalorder %s24, 1
      %p41 = por %p39, %p40
      %p42 = scmp.ne.s32.totalorder %s34, %s37
      %p43 = scmp.eq.s32.totalorder %s24, 0
      %p44 = por %p42, %p43
      %p45 = scmp.ne.s32.totalorder %s34, %s37
      %p46 = scmp.eq.s32.totalorder %s29, 1
      %p47 = por %p45, %p46
      %p48 = scmp.ne.s32.totalorder %s37, %s38
      %p49 = scmp.eq.s32.totalorder %s29, 0
      %p50 = por %p48, %p49
      %p51 = scmp.ne.s32.totalorder %s37, %s38
      %p52 = scmp.eq.s32.totalorder %s30, 1
      %p53 = por %p51, %p52
      %p55 = scmp.ne.s32.totalorder %s38, %s54
      %p56 = scmp.eq.s32.totalorder %s30, 0
      %p57 = por %p55, %p56
      %s59 = sadd.s32 %s58, 1
      %p62 = scmp.eq.s32.totalorder %s24, 1
      %p63 = scmp.ne.s32.totalorder %s58, %s60
      %p64 = scmp.eq.s32.totalorder %s24, 0
      %p65 = por %p63, %p64
      %p66 = scmp.ne.s32.totalorder %s58, %s60
      %p67 = scmp.eq.s32.totalorder %s29, 1
      %p68 = por %p66, %p67
      %p69 = scmp.ne.s32.totalorder %s60, %s61
      %p70 = scmp.eq.s32.totalorder %s29, 0
      %p71 = por %p69, %p70
      %p72 = scmp.ne.s32.totalorder %s60, %s61
      %p73 = scmp.eq.s32.totalorder %s30, 1
      %p74 = por %p72, %p73
      %p76 = scmp.ne.s32.totalorder %s61, %s75
      %p77 = scmp.eq.s32.totalorder %s30, 0
      %p78 = por %p76, %p77
      %s80 = sadd.s32 %s79, 1
      %p83 = scmp.eq.s32.totalorder %s24, 1
      %p84 = scmp.ne.s32.totalorder %s79, %s81
      %p85 = scmp.eq.s32.totalorder %s24, 0
      %p86 = por %p84, %p85
      %p87 = scmp.ne.s32.totalorder %s79, %s81
      %p88 = scmp.eq.s32.totalorder %s29, 1
      %p89 = por %p87, %p88
      %p90 = scmp.ne.s32.totalorder %s81, %s82
      %p91 = scmp.eq.s32.totalorder %s29, 0
      %p92 = por %p90, %p91
      %p93 = scmp.ne.s32.totalorder %s81, %s82
      %p94 = scmp.eq.s32.totalorder %s30, 1
      %p95 = por %p93, %p94
      %p97 = scmp.ne.s32.totalorder %s82, %s96
      %p98 = scmp.eq.s32.totalorder %s30, 0
      %p99 = por %p97, %p98
      %s101 = sadd.s32 %s100, 1
      %p104 = scmp.eq.s32.totalorder %s24, 1
      %p105 = scmp.ne.s32.totalorder %s100, %s102
      %p106 = scmp.eq.s32.totalorder %s24, 0
      %p107 = por %p105, %p106
      %p108 = scmp.ne.s32.totalorder %s100, %s102
      %p109 = scmp.eq.s32.totalorder %s29, 1
      %p110 = por %p108, %p109
      %p111 = scmp.ne.s32.totalorder %s102, %s103
      %p112 = scmp.eq.s32.totalorder %s29, 0
      %p113 = por %p111, %p112
      %p114 = scmp.ne.s32.totalorder %s102, %s103
      %p115 = scmp.eq.s32.totalorder %s30, 1
      %p116 = por %p114, %p115
      %p118 = scmp.ne.s32.totalorder %s103, %s117
      %p119 = scmp.eq.s32.totalorder %s30, 0
      %p120 = por %p118, %p119
      %s122 = sadd.s32 %s121, 1
      %p125 = scmp.eq.s32.totalorder %s24, 1
      %p126 = scmp.ne.s32.totalorder %s121, %s123
      %p127 = scmp.eq.s32.totalorder %s24, 0
      %p128 = por %p126, %p127
      %p129 = scmp.ne.s32.totalorder %s121, %s123
      %p130 = scmp.eq.s32.totalorder %s29, 1
      %p131 = por %p129, %p130
      %p132 = scmp.ne.s32.totalorder %s123, %s124
      %p133 = scmp.eq.s32.totalorder %s29, 0
      %p134 = por %p132, %p133
      %p135 = scmp.ne.s32.totalorder %s123, %s124
      %p136 = scmp.eq.s32.totalorder %s30, 1
      %p137 = por %p135, %p136
      %p139 = scmp.ne.s32.totalorder %s124, %s138
      %p140 = scmp.eq.s32.totalorder %s30, 0
      %p141 = por %p139, %p140
      %s143 = sadd.s32 %s142, 1
      %p146 = scmp.eq.s32.totalorder %s24, 1
      %p147 = scmp.ne.s32.totalorder %s142, %s144
      %p148 = scmp.eq.s32.totalorder %s24, 0
      %p149 = por %p147, %p148
      %p150 = scmp.ne.s32.totalorder %s142, %s144
      %p151 = scmp.eq.s32.totalorder %s29, 1
      %p152 = por %p150, %p151
      %p153 = scmp.ne.s32.totalorder %s144, %s145
      %p154 = scmp.eq.s32.totalorder %s29, 0
      %p155 = por %p153, %p154
      %p156 = scmp.ne.s32.totalorder %s144, %s145
      %p157 = scmp.eq.s32.totalorder %s30, 1
      %p158 = por %p156, %p157
      %p160 = scmp.ne.s32.totalorder %s145, %s159
      %p161 = scmp.eq.s32.totalorder %s30, 0
      %p162 = por %p160, %p161
      %s163 = ssub.s32 %s24, %s31
      %p164 = scmp.eq.s32.totalorder %s163, 0
      %s166 = sadd.s32 %s165, 1
      %s167 = scalar_select %p164, %s165, %s166
      %p170 = pneg %p164
      %p171 = scmp.eq.s32.totalorder %s24, 1
      %p172 = por %p170, %p171
      %p173 = scmp.ne.s32.totalorder %s165, %s168
      %p174 = scmp.eq.s32.totalorder %s24, 0
      %p175 = por %p173, %p174
      %p176 = scmp.ne.s32.totalorder %s165, %s168
      %p177 = scmp.eq.s32.totalorder %s29, 1
      %p178 = por %p176, %p177
      %p179 = scmp.ne.s32.totalorder %s168, %s169
      %p180 = scmp.eq.s32.totalorder %s29, 0
      %p181 = por %p179, %p180
      %p182 = scmp.ne.s32.totalorder %s168, %s169
      %p183 = scmp.eq.s32.totalorder %s30, 1
      %p184 = por %p182, %p183
      %p186 = scmp.ne.s32.totalorder %s169, %s185
      %p187 = scmp.eq.s32.totalorder %s30, 0
      %p188 = por %p186, %p187
      %p189 = scmp.le.s32.totalorder 1, %s24
      %p190 = scmp.lt.s32.totalorder %s24, 3
      %p191 = pnand %p189, %p190
      %p192 = pneg %p191
      // Predicated region
      $region9: #{tpu_custom_call.1} parent=5 // pred_check
        _
      $region10: #{tpu_custom_call.1} parent=5 // pred_check_branch
        %194 = sbr.rel (%p191) target = $region12
      $region11: #{tpu_custom_call.1} parent=5 // pred_region
        %s195 = ssub.s32 %s24, 1
        // Predicated region
        $region13: #{tpu_custom_call.1} parent=11 // pred_check
          %p196 = pneg %p71
        $region14: #{tpu_custom_call.1} parent=11 // pred_check_branch
          %198 = sbr.rel (%p196) target = $region16
        $region15: #{tpu_custom_call.1} parent=11 // pred_region
          _
        $region16: #{tpu_custom_call.1} parent=11 // pred_fallthru
          _
        // Predicated region
        $region17: #{tpu_custom_call.1} parent=11 // pred_check
          %p199 = pneg %p92
        $region18: #{tpu_custom_call.1} parent=11 // pred_check_branch
          %201 = sbr.rel (%p199) target = $region20
        $region19: #{tpu_custom_call.1} parent=11 // pred_region
          _
        $region20: #{tpu_custom_call.1} parent=11 // pred_fallthru
          _
        // Predicated region
        $region21: #{tpu_custom_call.1} parent=11 // pred_check
          %p202 = pneg %p113
        $region22: #{tpu_custom_call.1} parent=11 // pred_check_branch
          %204 = sbr.rel (%p202) target = $region24
        $region23: #{tpu_custom_call.1} parent=11 // pred_region
          _
        $region24: #{tpu_custom_call.1} parent=11 // pred_fallthru
          _
        // Predicated region
        $region25: #{tpu_custom_call.1} parent=11 // pred_check
          %p205 = pneg %p134
        $region26: #{tpu_custom_call.1} parent=11 // pred_check_branch
          %207 = sbr.rel (%p205) target = $region28
        $region27: #{tpu_custom_call.1} parent=11 // pred_region
          _
        $region28: #{tpu_custom_call.1} parent=11 // pred_fallthru
          _
        // Predicated region
        $region29: #{tpu_custom_call.1} parent=11 // pred_check
          %p208 = pneg %p155
        $region30: #{tpu_custom_call.1} parent=11 // pred_check_branch
          %210 = sbr.rel (%p208) target = $region32
        $region31: #{tpu_custom_call.1} parent=11 // pred_region
          _
        $region32: #{tpu_custom_call.1} parent=11 // pred_fallthru
          _
      $region12: #{tpu_custom_call.1} parent=5 // pred_fallthru
        _
      %p211 = scmp.lt.s32.totalorder %s24, 2
      // Predicated region
      $region33: #{tpu_custom_call.1} parent=5 // pred_check
        %p212 = pneg %p211
      $region34: #{tpu_custom_call.1} parent=5 // pred_check_branch
        %214 = sbr.rel (%p212) target = $region36
      $region35: #{tpu_custom_call.1} parent=5 // pred_region
        // Predicated region
        $region37: #{tpu_custom_call.1} parent=35 // pred_check
          %p215 = pneg %p44
        $region38: #{tpu_custom_call.1} parent=35 // pred_check_branch
          %217 = sbr.rel (%p215) target = $region40
        $region39: #{tpu_custom_call.1} parent=35 // pred_region
          %s218 = smul.u32 2, %s24
          %p219 = scmp.lt.s32.totalorder %s218, 3
          %s220 = scalar_select %p219, %s218, 3
          %s221 = scalar_lea.vmem %s1, %s220
          %s222 = smul.u32 2, %s24
        $region40: #{tpu_custom_call.1} parent=35 // pred_fallthru
          _
      $region36: #{tpu_custom_call.1} parent=5 // pred_fallthru
        _
      %p223 = scmp.le.s32.totalorder 1, %s24
      %p224 = scmp.lt.s32.totalorder %s24, 3
      %p225 = pnand %p223, %p224
      %p226 = pneg %p225
      // Predicated region
      $region41: #{tpu_custom_call.1} parent=5 // pred_check
        _
      $region42: #{tpu_custom_call.1} parent=5 // pred_check_branch
        %228 = sbr.rel (%p225) target = $region44
      $region43: #{tpu_custom_call.1} parent=5 // pred_region
        %s229 = ssub.s32 %s24, 1
        %s230 = smul.u32 2, %s29
        %p231 = scmp.lt.s32.totalorder %s230, 3
        %s232 = scalar_select %p231, %s230, 3
        %s233 = scalar_lea.vmem %s1, %s232
        %p234 = pneg %p50
        %p235 = pneg %p47
        %p236 = pneg %p71
        %p237 = pneg %p68
        %p238 = pneg %p92
        %p239 = pneg %p89
        %p240 = pneg %p113
        %p241 = pneg %p110
        %p242 = pneg %p134
        %p243 = pneg %p131
        %p244 = pneg %p155
        %p245 = pneg %p152
        %p246 = pneg %p181
        %p247 = pneg %p178
        %s248 = sand.u32 %s168, 1
        %s249 = scalar_lea.sflag [#allocation5], %s248
        %s250 = sand.u32 %s168, 1
        %s251 = smul.addr %s250, 2
        %s252 = scalar_lea.vmem [#allocation4], %s251
        %s253 = smul.u32 2, %s29
        %p254 = scmp.lt.s32.totalorder %s253, 3
        %s255 = scalar_select %p254, %s253, 3
        %s256 = scalar_lea.vmem %s1, %s255
        %s257 = smul.u32 2, %s29
        %s258 = smul.u32 2, %s29
        %s259 = sld [smem:[#allocation3]]
        %s260 = sld [smem:[#allocation3 + $0x1]]
        %v261 = vld [vmem:[%s256] sm:$0x3]
        %v262 = vstv %s259
        %v263 = vmul.f32 %v261, %v262
        %v264 = vand.u32 2147483647, %v263
        %vm265 = vcmp.le.f32.partialorder %v264, 0.7853982
        %vm266 = vcmp.lt.s32.totalorder %v263, 0
        %v267 = vand.u32 %v263, 2139095040
        %v268 = vshrl.u32 %v267, 23
        %v269 = vsub.s32 %v268, 127
        %v270 = vand.u32 2147483647, %v263
        %v271 = vand.u32 %v270, 8388607
        %v272 = vor.u32 %v271, 8388608
        %v273 = vsub.s32 0, %v272
        %v274 = vadd.s32 %v269, 1
        %vm275 = vcmp.gt.s32.totalorder %v274, 0
        %v276 = vsel %vm275, %v274, 0
        %v277 = vshrl.u32 %v276, 5
        %v278 = vand.u32 %v276, 31
        %v279 = vsub.s32 32, %v278
        %v280 = vshrl.u32 683565275, %v279
        %v281 = vshll.u32 683565275, %v278
        %v282 = vshrl.u32 2475754826, %v279
        %v283 = vor.u32 %v281, %v282
        %v284 = vshll.u32 2475754826, %v278
        %v285 = vshrl.u32 2131351028, %v279
        %v286 = vor.u32 %v284, %v285
        %v287 = vshll.u32 2131351028, %v278
        %v288 = vshrl.u32 2102212464, %v279
        %v289 = vor.u32 %v287, %v288
        %v290 = vshll.u32 2102212464, %v278
        %v291 = vshrl.u32 920167782, %v279
        %v292 = vor.u32 %v290, %v291
        %v293 = vshll.u32 920167782, %v278
        %v294 = vshrl.u32 1326507024, %v279
        %v295 = vor.u32 %v293, %v294
        %vm296 = vcmp.lt.s32.totalorder %v277, 1
        %vm297 = vcmp.lt.s32.totalorder %v277, 2
        %vm298 = vcmp.lt.s32.totalorder %v277, 3
        %vm299 = vcmp.lt.s32.totalorder %v277, 4
        %v300 = vsel %vm296, %v280, %v283
        %v301 = vsel %vm299, %v289, 2102212464
        %v302 = vsel %vm298, %v286, %v301
        %v303 = vsel %vm297, %v300, %v302
        %v304 = vsel %vm296, %v283, %v286
        %v305 = vsel %vm299, %v292, 920167782
        %v306 = vsel %vm298, %v289, %v305
        %v307 = vsel %vm297, %v304, %v306
        %v308 = vsel %vm296, %v286, %v289
        %v309 = vsel %vm299, %v295, 1326507024
        %v310 = vsel %vm298, %v292, %v309
        %v311 = vsel %vm297, %v308, %v310
        %v312 = vshll.u32 %v272, 8
        %v313 = vand.u32 %v312, 65535
        %v314 = vshrl.u32 %v312, 16
        %v315 = vand.u32 %v311, 65535
        %v316 = vshrl.u32 %v311, 16
        %v317 = vmul.u32 %v313, %v315
        %v318 = vmul.u32 %v313, %v316
        %v319 = vmul.u32 %v314, %v315
        %v320 = vmul.u32 %v314, %v316
        %v321 = vshll.u32 %v318, 16
        %v322 = vshrl.u32 %v318, 16
        %v323 = vshll.u32 %v319, 16
        %v324 = vshrl.u32 %v319, 16
        %vm325 = vc.u32 %v317, %v321
        %v326 = vsel %vm325, 1, 0
        %v327 = vadd.s32 %v317, %v321
        %v328 = vadd.s32 %v320, %v326
        %vm329 = vc.u32 %v327, %v323
        %v330 = vsel %vm329, 1, 0
        %v331 = vadd.s32 %v327, %v323
        %v332 = vadd.s32 %v328, %v330
        %v333 = vadd.s32 %v332, %v322
        %v334 = vadd.s32 %v333, %v324
        %v335 = vand.u32 %v312, 65535
        %v336 = vshrl.u32 %v312, 16
        %v337 = vand.u32 %v307, 65535
        %v338 = vshrl.u32 %v307, 16
        %v339 = vmul.u32 %v335, %v337
        %v340 = vmul.u32 %v335, %v338
        %v341 = vmul.u32 %v336, %v337
        %v342 = vmul.u32 %v336, %v338
        %v343 = vshll.u32 %v340, 16
        %v344 = vshrl.u32 %v340, 16
        %v345 = vshll.u32 %v341, 16
        %v346 = vshrl.u32 %v341, 16
        %vm347 = vc.u32 %v339, %v343
        %v348 = vsel %vm347, 1, 0
        %v349 = vadd.s32 %v339, %v343
        %v350 = vadd.s32 %v342, %v348
        %vm351 = vc.u32 %v349, %v345
        %v352 = vsel %vm351, 1, 0
        %v353 = vadd.s32 %v349, %v345
        %v354 = vadd.s32 %v350, %v352
        %v355 = vadd.s32 %v354, %v344
        %v356 = vadd.s32 %v355, %v346
        %v357 = vmul.u32 %v312, %v303
        %v358 = vadd.s32 %v334, %v353
        %vm359 = vc.u32 %v334, %v353
        %v360 = vadd.s32 %v356, 1
        %v361 = vsel %vm359, %v360, %v356
        %v362 = vadd.s32 %v357, %v361
        %v363 = vadd.s32 %v362, 536870912
        %v364 = vshrl.u32 %v363, 30
        %v365 = vshll.u32 %v364, 30
        %v366 = vsub.s32 %v362, %v365
        %vm367 = vcmp.lt.s32.totalorder %v366, 0
        %v368 = vsub.s32 0, %v366
        %v369 = vsel %vm367, %v368, %v366
        %v370 = vclz %v369
        %v371 = vsub.s32 %v370, 2
        %vm372 = vcmp.gt.s32.totalorder 0, %v371
        %v373 = vsel %vm372, 0, %v371
        %v374 = vsub.s32 32, %v373
        %v375 = vshll.u32 %v366, %v373
        %v376 = vshrl.u32 %v358, %v374
        %v377 = vor.u32 %v375, %v376
        %v378 = vsub.s32 4294967266, %v373
        %v379 = vadd.s32 %v378, 127
        %v380 = vshll.u32 %v379, 23
        %v381 = vor.u32 4788187, %v380
        %v382 = vand.u32 2147483647, %v381
        %v384 = vcvt.s32.f32 %v377
        %v385 = vmul.f32 %v384, %v382
        %v386 = vxor.u32 %v385, 2147483648
        %v387 = vsel %vm266, %v386, %v385
        %v388 = vsub.s32 4, %v364
        %v389 = vsel %vm266, %v388, %v364
        %v390 = vsel %vm265, %v263, %v387
        %v391 = vsel %vm265, 0, %v389
        %v392 = vmul.f32 %v390, %v390
        %v393 = vmul.f32 %v392, -0.001358992
        %v394 = vadd.f32 %v393, 0.041655596
        %v395 = vmul.f32 %v392, %v394
        %v396 = vadd.f32 %v395, -0.4999988
        %v397 = vmul.f32 %v392, %v396
        %v398 = vadd.f32 1.0, %v397
        %v399 = vmul.f32 %v390, %v390
        %v400 = vmul.f32 %v399, -0.00019511016
        %v401 = vadd.f32 %v400, 0.008332121
        %v402 = vmul.f32 %v399, %v401
        %v403 = vadd.f32 %v402, -0.16666654
        %v404 = vmul.f32 %v399, %v403
        %v405 = vadd.f32 %v404, 1.0
        %v406 = vmul.f32 %v405, %v390
        %vm407 = vweird.f32 %v263
        %v408 = vadd.s32 %v391, 3
        %v409 = vand.u32 %v408, 3
        %vm410 = vcmp.lt.s32.totalorder %v409, 2
        %vm411 = vcmp.eq.s32.totalorder %v409, 0
        %v412 = vxor.u32 %v406, 2147483648
        %v413 = vsel %vm411, %v398, %v412
        %vm414 = vcmp.eq.s32.totalorder %v409, 2
        %v415 = vxor.u32 %v398, 2147483648
        %v416 = vsel %vm414, %v415, %v406
        %v417 = vsel %vm410, %v413, %v416
        %v418 = vsel %vm407, nan, %v417
        %v419 = vld [vmem:[%s2] sm:$0xff]
        %v420 = vld [vmem:[%s2 + $0x8] sm:$0xff]
        %v421 = vld [vmem:[%s2 + $0x10] sm:$0xff]
        %v422 = vld [vmem:[%s2 + $0x18] sm:$0xff]
        %v423 = vld [vmem:[%s3] sm:$0xff]
        %v424 = vld [vmem:[%s3 + $0x8] sm:$0xff]
        %v425 = vld [vmem:[%s3 + $0x10] sm:$0xff]
        %v426 = vld [vmem:[%s3 + $0x18] sm:$0xff]
        %428 = vset.pattern.permute.xlu0 0
        %429 = vperm.xlu0 %428, %v423
        %v430 = vpop.permute.xlu0 %429
        %433 = vset.pattern.permute.xlu0 0
        %434 = vperm.xlu0 %433, %v424
        %v435 = vpop.permute.xlu0 %434
        %438 = vset.pattern.permute.xlu0 0
        %439 = vperm.xlu0 %438, %v425
        %v440 = vpop.permute.xlu0 %439
        %443 = vset.pattern.permute.xlu0 0
        %444 = vperm.xlu0 %443, %v426
        %v445 = vpop.permute.xlu0 %444
        %v448 = vperm.slane %v418, 0
        %v449 = vperm.slane %v418, 1
        %vm450 = vcmask 7168
        %v452 = vsel %vm450, %v419, 0
        %v455 = vsel %vm450, %v420, 0
        %v458 = vsel %vm450, %v421, 0
        %v461 = vsel %vm450, %v422, 0
        %vm463 = vcmask 1040384
        %v464 = vsel %vm463, %v448, 0
        %v466 = vsel %vm463, %v449, 0
        %468 = vmatpush.msra.mxu0 0.0
        %469 = vmatpush.msra.mxu0 0.0
        %470 = vmatpush.msra.mxu0 0.0
        %471 = vmatpush.msra.mxu0 0.0
        %472 = vmatpush.msra.mxu0 0.0
        %473 = vmatpush.msra.mxu0 0.0
        %474 = vmatpush.msra.mxu0 0.0
        %475 = vmatpush.msra.mxu0 0.0
        %476 = vmatpush.msra.mxu0 0.0
        %477 = vmatpush.msra.mxu0 0.0
        %478 = vmatpush.msra.mxu0 0.0
        %479 = vmatpush.msra.mxu0 0.0
        %480 = vmatpush.msra.mxu0 0.0
        %481 = vmatpush.msra.mxu0 0.0
        %482 = vmatpush.msra.mxu0 0.0
        %483 = vmatpush.msra.mxu0 %v464
        %484 = vmatmul.f32.gmra.mxu0 %v452
        %v485 = vpop.f32.mrf.mxu0
        %v486 = vadd.f32 %v430, %v485
        %487 = vmatmul.f32.gmra.mxu0 %v455
        %v488 = vpop.f32.mrf.mxu0
        %v489 = vadd.f32 %v435, %v488
        %490 = vmatmul.f32.gmra.mxu0 %v458
        %v491 = vpop.f32.mrf.mxu0
        %v492 = vadd.f32 %v440, %v491
        %493 = vmatmul.f32.gmra.mxu0 %v461
        %v494 = vpop.f32.mrf.mxu0
        %v495 = vadd.f32 %v445, %v494
        %496 = vdwg.mxu0
        %497 = vmatpush.msra.mxu0 0.0
        %498 = vmatpush.msra.mxu0 0.0
        %499 = vmatpush.msra.mxu0 0.0
        %500 = vmatpush.msra.mxu0 0.0
        %501 = vmatpush.msra.mxu0 0.0
        %502 = vmatpush.msra.mxu0 0.0
        %503 = vmatpush.msra.mxu0 0.0
        %504 = vmatpush.msra.mxu0 0.0
        %505 = vmatpush.msra.mxu0 0.0
        %506 = vmatpush.msra.mxu0 0.0
        %507 = vmatpush.msra.mxu0 0.0
        %508 = vmatpush.msra.mxu0 0.0
        %509 = vmatpush.msra.mxu0 0.0
        %510 = vmatpush.msra.mxu0 0.0
        %511 = vmatpush.msra.mxu0 0.0
        %512 = vmatpush.msra.mxu0 %v466
        %513 = vmatmul.f32.gmra.mxu0 %v452
        %v514 = vpop.f32.mrf.mxu0
        %v515 = vadd.f32 %v430, %v514
        %516 = vmatmul.f32.gmra.mxu0 %v455
        %v517 = vpop.f32.mrf.mxu0
        %v518 = vadd.f32 %v435, %v517
        %519 = vmatmul.f32.gmra.mxu0 %v458
        %v520 = vpop.f32.mrf.mxu0
        %v521 = vadd.f32 %v440, %v520
        %522 = vmatmul.f32.gmra.mxu0 %v461
        %v523 = vpop.f32.mrf.mxu0
        %v524 = vadd.f32 %v445, %v523
        %525 = vdwg.mxu0
        %v526 = vtanh.pop %v486
        %v527 = vtanh.pop %v515
        %v528 = vtanh.pop %v489
        %v529 = vtanh.pop %v518
        %v530 = vtanh.pop %v492
        %v531 = vtanh.pop %v521
        %v532 = vtanh.pop %v495
        %v533 = vtanh.pop %v524
        %v534 = vld [vmem:[%s4] sm:$0xff]
        %v535 = vld [vmem:[%s4 + $0x8] sm:$0xff]
        %v536 = vld [vmem:[%s4 + $0x10] sm:$0xff]
        %v537 = vld [vmem:[%s4 + $0x18] sm:$0xff]
        %v538 = vld [vmem:[%s5] sm:$0xff]
        %v539 = vld [vmem:[%s5 + $0x8] sm:$0xff]
        %v540 = vld [vmem:[%s5 + $0x10] sm:$0xff]
        %v541 = vld [vmem:[%s5 + $0x18] sm:$0xff]
        %543 = vset.pattern.permute.xlu0 0
        %544 = vperm.xlu0 %543, %v538
        %v545 = vpop.permute.xlu0 %544
        %548 = vset.pattern.permute.xlu0 0
        %549 = vperm.xlu0 %548, %v539
        %v550 = vpop.permute.xlu0 %549
        %553 = vset.pattern.permute.xlu0 0
        %554 = vperm.xlu0 %553, %v540
        %v555 = vpop.permute.xlu0 %554
        %558 = vset.pattern.permute.xlu0 0
        %559 = vperm.xlu0 %558, %v541
        %v560 = vpop.permute.xlu0 %559
        %vm562 = vcmask 261120
        %v564 = vsel %vm562, %v534, 0
        %v567 = vsel %vm562, %v535, 0
        %v570 = vsel %vm562, %v536, 0
        %v573 = vsel %vm562, %v537, 0
        %575 = vmatpush.msra.mxu0 0.0
        %576 = vmatpush.msra.mxu0 0.0
        %577 = vmatpush.msra.mxu0 0.0
        %578 = vmatpush.msra.mxu0 0.0
        %579 = vmatpush.msra.mxu0 0.0
        %580 = vmatpush.msra.mxu0 0.0
        %581 = vmatpush.msra.mxu0 0.0
        %582 = vmatpush.msra.mxu0 0.0
        %583 = vmatpush.msra.mxu0 0.0
        %584 = vmatpush.msra.mxu0 0.0
        %585 = vmatpush.msra.mxu0 0.0
        %586 = vmatpush.msra.mxu0 0.0
        %587 = vmatpush.msra.mxu0 %v532
        %588 = vmatpush.msra.mxu0 %v530
        %589 = vmatpush.msra.mxu0 %v528
        %590 = vmatpush.msra.mxu0 %v526
        %591 = vmatmul.f32.gmra.mxu0 %v564
        %v592 = vpop.f32.mrf.mxu0
        %v593 = vadd.f32 %v545, %v592
        %594 = vmatmul.f32.gmra.mxu0 %v567
        %v595 = vpop.f32.mrf.mxu0
        %v596 = vadd.f32 %v550, %v595
        %597 = vmatmul.f32.gmra.mxu0 %v570
        %v598 = vpop.f32.mrf.mxu0
        %v599 = vadd.f32 %v555, %v598
        %600 = vmatmul.f32.gmra.mxu0 %v573
        %v601 = vpop.f32.mrf.mxu0
        %v602 = vadd.f32 %v560, %v601
        %603 = vdwg.mxu0
        %604 = vmatpush.msra.mxu0 0.0
        %605 = vmatpush.msra.mxu0 0.0
        %606 = vmatpush.msra.mxu0 0.0
        %607 = vmatpush.msra.mxu0 0.0
        %608 = vmatpush.msra.mxu0 0.0
        %609 = vmatpush.msra.mxu0 0.0
        %610 = vmatpush.msra.mxu0 0.0
        %611 = vmatpush.msra.mxu0 0.0
        %612 = vmatpush.msra.mxu0 0.0
        %613 = vmatpush.msra.mxu0 0.0
        %614 = vmatpush.msra.mxu0 0.0
        %615 = vmatpush.msra.mxu0 0.0
        %616 = vmatpush.msra.mxu0 %v533
        %617 = vmatpush.msra.mxu0 %v531
        %618 = vmatpush.msra.mxu0 %v529
        %619 = vmatpush.msra.mxu0 %v527
        %620 = vmatmul.f32.gmra.mxu0 %v564
        %v621 = vpop.f32.mrf.mxu0
        %v622 = vadd.f32 %v545, %v621
        %623 = vmatmul.f32.gmra.mxu0 %v567
        %v624 = vpop.f32.mrf.mxu0
        %v625 = vadd.f32 %v550, %v624
        %626 = vmatmul.f32.gmra.mxu0 %v570
        %v627 = vpop.f32.mrf.mxu0
        %v628 = vadd.f32 %v555, %v627
        %629 = vmatmul.f32.gmra.mxu0 %v573
        %v630 = vpop.f32.mrf.mxu0
        %v631 = vadd.f32 %v560, %v630
        %632 = vdwg.mxu0
        %v633 = vtanh.pop %v593
        %v634 = vtanh.pop %v622
        %v635 = vtanh.pop %v596
        %v636 = vtanh.pop %v625
        %v637 = vtanh.pop %v599
        %v638 = vtanh.pop %v628
        %v639 = vtanh.pop %v602
        %v640 = vtanh.pop %v631
        %v641 = vld [vmem:[%s6] sm:$0x1]
        %v642 = vstv %s260
        %v644 = vsel %vm562, %v641, 0
        %646 = vmatpush.msra.mxu0 0.0
        %647 = vmatpush.msra.mxu0 0.0
        %648 = vmatpush.msra.mxu0 0.0
        %649 = vmatpush.msra.mxu0 0.0
        %650 = vmatpush.msra.mxu0 0.0
        %651 = vmatpush.msra.mxu0 0.0
        %652 = vmatpush.msra.mxu0 0.0
        %653 = vmatpush.msra.mxu0 0.0
        %654 = vmatpush.msra.mxu0 0.0
        %655 = vmatpush.msra.mxu0 0.0
        %656 = vmatpush.msra.mxu0 0.0
        %657 = vmatpush.msra.mxu0 0.0
        %658 = vmatpush.msra.mxu0 %v639
        %659 = vmatpush.msra.mxu0 %v637
        %660 = vmatpush.msra.mxu0 %v635
        %661 = vmatpush.msra.mxu0 %v633
        %662 = vmatmul.f32.gmra.mxu0 %v644
        %v663 = vpop.f32.mrf.mxu0
        %v664 = vadd.f32 %v642, %v663
        %665 = vdwg.mxu0
        %666 = vmatpush.msra.mxu0 0.0
        %667 = vmatpush.msra.mxu0 0.0
        %668 = vmatpush.msra.mxu0 0.0
        %669 = vmatpush.msra.mxu0 0.0
        %670 = vmatpush.msra.mxu0 0.0
        %671 = vmatpush.msra.mxu0 0.0
        %672 = vmatpush.msra.mxu0 0.0
        %673 = vmatpush.msra.mxu0 0.0
        %674 = vmatpush.msra.mxu0 0.0
        %675 = vmatpush.msra.mxu0 0.0
        %676 = vmatpush.msra.mxu0 0.0
        %677 = vmatpush.msra.mxu0 0.0
        %678 = vmatpush.msra.mxu0 %v640
        %679 = vmatpush.msra.mxu0 %v638
        %680 = vmatpush.msra.mxu0 %v636
        %681 = vmatpush.msra.mxu0 %v634
        %682 = vmatmul.f32.gmra.mxu0 %v644
        %v683 = vpop.f32.mrf.mxu0
        %v684 = vadd.f32 %v642, %v683
        %685 = vdwg.mxu0
        %v688 = vrot.slane %v684, 7
        %v689 = vsel %vm463, %v664, %v688
        %v691 = vlaneseq
        %vm692 = vcmp.ge.s32.totalorder %v691, 0
        %vm693 = vcmp.lt.s32.totalorder %v691, 256
        %vm694 = vmand %vm692, %vm693
        %695 = vst.msk [vmem:[%s252] sm:$0x3] %vm694, %v689
        %s696 = sand.u32 %s168, 1
        %s697 = scalar_lea.sflag [#allocation5], %s696
        %s698 = sand.u32 %s168, 1
        %s699 = smul.addr %s698, 2
        %s700 = scalar_lea.vmem [#allocation4], %s699
        // Predicated region
        $region45: #{tpu_custom_call.1} parent=43 // pred_check
          %p701 = pneg %p178
        $region46: #{tpu_custom_call.1} parent=43 // pred_check_branch
          %703 = sbr.rel (%p701) target = $region48
        $region47: #{tpu_custom_call.1} parent=43 // pred_region
          %s704 = smul.u32 2, %s29
          %706 = vsyncadd %s697, 0
          %s707 = scalar_lea.hbm %s7, %s704
          %s709 = sshll.u32 %s700, 4
          %s710 = int_to_ptr.vmem [resolvable:$true] %s709
          %s711 = sshll.u32 %s707, 4
          %s712 = int_to_ptr.hbm [resolvable:$true] %s711
          %714 = dma.vmem_to_hbm [thread:$0]  %s710, 32, %s712, %s697
        $region48: #{tpu_custom_call.1} parent=43 // pred_fallthru
          _
      $region44: #{tpu_custom_call.1} parent=5 // pred_fallthru
        _
      %p715 = scmp.le.s32.totalorder 2, %s24
      // Predicated region
      $region49: #{tpu_custom_call.1} parent=5 // pred_check
        %p716 = pneg %p715
      $region50: #{tpu_custom_call.1} parent=5 // pred_check_branch
        %718 = sbr.rel (%p716) target = $region52
      $region51: #{tpu_custom_call.1} parent=5 // pred_region
        %s719 = ssub.s32 %s24, 2
        // Predicated region
        $region53: #{tpu_custom_call.1} parent=51 // pred_check
          %p720 = pneg %p184
        $region54: #{tpu_custom_call.1} parent=51 // pred_check_branch
          %722 = sbr.rel (%p720) target = $region56
        $region55: #{tpu_custom_call.1} parent=51 // pred_region
          %s723 = sand.u32 %s169, 1
          %s724 = scalar_lea.sflag [#allocation5], %s723
          %s725 = sand.u32 %s169, 1
          %s726 = smul.addr %s725, 2
          %s727 = scalar_lea.vmem [#allocation4], %s726
          %729 = dma.done %s724, 32
        $region56: #{tpu_custom_call.1} parent=51 // pred_fallthru
          _
      $region52: #{tpu_custom_call.1} parent=5 // pred_fallthru
        _
    $region6: #{tpu_custom_call.1} parent=1 // loop_footer
      %s28 = sadd.s32 1, %s24
    $region7: #{tpu_custom_call.1} parent=1 // loop_footer_branch
      %23 = sbr.rel target = $region3
    $region8: #{tpu_custom_call.1} parent=1 // loop_exit
      _
    %730 = vsyncpa [#allocation5], 1
    %s731 = scalar_lea.sflag [#allocation5], 1
    %732 = vsyncpa %s731, 1

</llo_original>
